<compile_context>
chip_gen: v5e
topology: v5e:2x2
jax: 0.10.0
libtpu: 0.0.40
codegen_flags: <defaults>
</compile_context>

<pallas_src>
import functools

import numpy as np
import jax
import jax.numpy as jnp
from jax.experimental import pallas as pl
from jax.experimental.pallas import tpu as pltpu

INSERT_RATE = 0.4


def _round_up(x, m):
    return ((x + m - 1) // m) * m


def _pick_tile(n_pad):
    for t in (512, 256, 128):
        if n_pad % t == 0:
            return t
    return 128


# ----------------------------------------------------------------------------
# Kernel A: top-1 most-similar item table.  Row tiles are "parallel", the
# candidate-column axis is streamed as an "arbitrary" reduction with a per-lane
# running (max, col-id) carried in VMEM scratch; the cross-lane argmax happens
# once per row tile.
# ----------------------------------------------------------------------------
def _top1_sim_kernel(emb_rows_ref, emb_cols_t_ref, top1_ref, best_ref, bid_ref,
                     *, n_real):
    i = pl.program_id(0)
    j = pl.program_id(1)
    nj = pl.num_programs(1)
    tr = emb_rows_ref.shape[0]
    tc = emb_cols_t_ref.shape[1]

    @pl.when(j == 0)
    def _():
        best_ref[...] = jnp.full_like(best_ref, -jnp.inf)
        bid_ref[...] = jnp.zeros_like(bid_ref)

    # bf16 x bf16 -> f32 on the MXU.
    scores = jnp.dot(emb_rows_ref[...], emb_cols_t_ref[...],
                     preferred_element_type=jnp.float32)            # (tr, tc)

    col_ids = j * tc + jax.lax.broadcasted_iota(jnp.int32, (tr, tc), 1)
    row_start = i * tr
    col_start = j * tc

    def merge(s):
        upd = s > best_ref[...]          # strict > keeps the earliest col on ties
        bid_ref[...] = jnp.where(upd, col_ids, bid_ref[...])
        best_ref[...] = jnp.where(upd, s, best_ref[...])

    # Masking is only needed when this tile touches the diagonal (self-score)
    # or contains padded columns; all other tiles skip the iota/compare/select.
    needs_mask = (((col_start < row_start + tr) & (row_start < col_start + tc))
                  | (col_start + tc > n_real))

    @pl.when(needs_mask)
    def _():
        row_ids = row_start + jax.lax.broadcasted_iota(jnp.int32, (tr, tc), 0)
        invalid = (col_ids == row_ids) | (col_ids >= n_real)
        merge(jnp.where(invalid, -jnp.inf, scores))

    @pl.when(jnp.logical_not(needs_mask))
    def _():
        merge(scores)

    @pl.when(j == nj - 1)
    def _():
        best = best_ref[...]
        m = jnp.max(best, axis=1, keepdims=True)                    # (tr, 1)
        idx = jnp.min(jnp.where(best == m, bid_ref[...], jnp.int32(2 ** 30)),
                      axis=1, keepdims=True)
        top1_ref[...] = idx.astype(jnp.int32)


def compute_top1_table(item_embeddings):
    """top1[n] = argmax_{m != n} emb[n] . emb[m], as an (N,) int32 device array."""
    emb = jnp.asarray(item_embeddings, dtype=jnp.float32)
    n, d = emb.shape
    n_pad = _round_up(n, 128)
    tr = _pick_tile(n_pad)
    tc = _pick_tile(n_pad)

    emb_bf16 = jnp.zeros((n_pad, d), jnp.bfloat16).at[:n, :].set(
        emb.astype(jnp.bfloat16))
    emb_t = emb_bf16.T                                              # (d, n_pad)

    top1 = pl.pallas_call(
        functools.partial(_top1_sim_kernel, n_real=n),
        out_shape=jax.ShapeDtypeStruct((n_pad, 1), jnp.int32),
        grid=(n_pad // tr, n_pad // tc),
        in_specs=[
            pl.BlockSpec((tr, d), lambda i, j: (i, 0)),             # row tile
            pl.BlockSpec((d, tc), lambda i, j: (0, j)),             # candidate tile
        ],
        out_specs=pl.BlockSpec((tr, 1), lambda i, j: (i, 0)),
        scratch_shapes=[pltpu.VMEM((tr, tc), jnp.float32),          # per-lane max
                        pltpu.VMEM((tr, tc), jnp.int32)],           # per-lane col-id
        compiler_params=pltpu.CompilerParams(
            dimension_semantics=("parallel", "arbitrary"),
            vmem_limit_bytes=64 * 1024 * 1024),
    )(emb_bf16, emb_t)
    return top1[:n, 0]


# ----------------------------------------------------------------------------
# Kernel B: batched insertion.  bf16-triangle MXU cumsum + per-position
# one-hot accumulate into a lane-dense (bt, l_out) accumulator.
# ----------------------------------------------------------------------------
def _insert_kernel(seq_ref, sim_ref, ins_ref, val_ref, tri_ref, out_ref):
    bt, lp = seq_ref.shape
    l_out = out_ref.shape[1]

    seq = seq_ref[...]                       # item ids
    sim = sim_ref[...]                       # pre-gathered most-similar ids
    ins = ins_ref[...]                       # 1 -> insert similar item before pos
    valid = val_ref[...]                     # 1 -> position < seq_len

    # inclusive cumsum of insert flags via bf16 upper-triangle matmul
    # (0/1 inputs + f32 accumulation -> exact for any realistic L)
    c = jnp.dot(ins.astype(jnp.bfloat16), tri_ref[...],
                preferred_element_type=jnp.float32).astype(jnp.int32)  # (bt, lp)

    j_idx = jax.lax.broadcasted_iota(jnp.int32, (bt, lp), 1)
    pos_orig = j_idx + c                     # original item j lands at j + c[j]
    pos_ins = pos_orig - 1                   # inserted item goes just before it
    sentinel = jnp.int32(l_out)              # never matches a real output lane
    pos_orig = jnp.where(valid > 0, pos_orig, sentinel)
    pos_ins = jnp.where((ins > 0) & (valid > 0), pos_ins, sentinel)

    # scatter: per-position accumulate (no (bt, lp, l_out) 3-D temp -> no spill)
    p_lane = jax.lax.broadcasted_iota(jnp.int32, (bt, l_out), 1)
    acc = jnp.zeros((bt, l_out), jnp.int32)
    for k in range(lp):                      # static unroll, static lane slices
        po = pos_orig[:, k:k + 1]
        pi = pos_ins[:, k:k + 1]
        acc = (acc
               + jnp.where(p_lane == po, seq[:, k:k + 1], 0)
               + jnp.where(p_lane == pi, sim[:, k:k + 1], 0))
    out_ref[...] = acc


def item_insert_forward(sequences, seq_lens, item_embeddings,
                        insert_rate=INSERT_RATE, rng_key=None, block_rows=32):
    """Pallas-backed item-insert augmentation forward.

    sequences:       (B, L) int32 item ids, 0 = pad
    seq_lens:        (B,)   int32 valid lengths
    item_embeddings: (N, D) float32 item embedding table (similarity model)
    returns: (augmented (B, L_out) int32, new_seq_lens (B,) int32,
              ins_mask (B, L) int32, top1 (N,) int32)
    """
    sequences = jnp.asarray(sequences, dtype=jnp.int32)
    seq_lens = jnp.asarray(seq_lens, dtype=jnp.int32)
    B, L = sequences.shape

    # --- top-1 similar-item table: stays on device ---------------------------
    top1 = compute_top1_table(item_embeddings)                      # (N,)

    # --- on-device insert-position sampling (uniform k-subset per row) -------
    # Equivalent in distribution to np.random.choice(seq_len, k, replace=False).
    if rng_key is None:
        rng_key = jax.random.PRNGKey(0)
    r = jax.random.uniform(rng_key, (B, L), dtype=jnp.float32)
    pos = jnp.arange(L, dtype=jnp.int32)[None, :]
    valid = pos < seq_lens[:, None]
    keys = jnp.where(valid, r, 2.0)          # invalid positions rank last
    rank = jnp.argsort(jnp.argsort(keys, axis=-1), axis=-1)
    k = jnp.maximum(1, (insert_rate * seq_lens.astype(jnp.float32)).astype(jnp.int32))
    k = jnp.minimum(k, seq_lens)
    ins_mask = ((rank < k[:, None]) & valid).astype(jnp.int32)
    new_seq_lens = seq_lens + jnp.sum(ins_mask, axis=-1)

    sim_ids = jnp.take(top1, sequences, axis=0).astype(jnp.int32)   # (B, L)

    # --- pad to TPU-friendly, lane-dense shapes -------------------------------
    bt = block_rows
    b_pad = _round_up(max(B, bt), bt)
    lp = _round_up(L, 128)
    l_out_pad = _round_up(2 * L, 128)        # fixed worst-case output width

    def pad2(x):
        return jnp.zeros((b_pad, lp), jnp.int32).at[:B, :L].set(x)

    seq_p = pad2(sequences)
    sim_p = pad2(sim_ids)
    ins_p = pad2(ins_mask)
    val_p = pad2(valid.astype(jnp.int32))
    tri = (jnp.arange(lp)[:, None] <= jnp.arange(lp)[None, :]).astype(jnp.bfloat16)

    out = pl.pallas_call(
        _insert_kernel,
        out_shape=jax.ShapeDtypeStruct((b_pad, l_out_pad), jnp.int32),
        grid=(b_pad // bt,),
        in_specs=[
            pl.BlockSpec((bt, lp), lambda b: (b, 0)),               # seq
            pl.BlockSpec((bt, lp), lambda b: (b, 0)),               # sim
            pl.BlockSpec((bt, lp), lambda b: (b, 0)),               # insert mask
            pl.BlockSpec((bt, lp), lambda b: (b, 0)),               # valid mask
            pl.BlockSpec((lp, lp), lambda b: (0, 0)),               # tri: fetched once
        ],
        out_specs=pl.BlockSpec((bt, l_out_pad), lambda b: (b, 0)),
        compiler_params=pltpu.CompilerParams(
            dimension_semantics=("parallel",),
            vmem_limit_bytes=64 * 1024 * 1024),
    )(seq_p, sim_p, ins_p, val_p, tri)

    # pad_sequence pads to the max *actual* augmented length; this final scalar
    # max is the only remaining host sync.
    l_out = int(jnp.max(new_seq_lens))
    return out[:B, :l_out], new_seq_lens, ins_mask, top1


# TODO(synk): the faiss-KMeans intent clustering, query_encoder and InfoNCE loss
# composition of ICLRecAugmentation.forward are host-level orchestration of
# existing XLA ops and are not re-implemented as Pallas kernels here.


# ----------------------------------------------------------------------------
# Pure NumPy references (PyTorch forward semantics)
# ----------------------------------------------------------------------------
def _reference_insert(sequences, seq_lens, ins_mask, top1):
    B, _ = sequences.shape
    rows = []
    for i in range(B):
        row = []
        for j in range(int(seq_lens[i])):
            if ins_mask[i, j]:
                row.append(int(top1[sequences[i, j]]))   # most-similar item first
            row.append(int(sequences[i, j]))
        rows.append(row)
    l_out = max(len(r) for r in rows)
    out = np.zeros((B, l_out), dtype=np.int32)
    new_lens = np.zeros((B,), dtype=np.int32)
    for i, r in enumerate(rows):
        out[i, :len(r)] = r
        new_lens[i] = len(r)
    return out, new_lens


if __name__ == "__main__":
    key = jax.random.PRNGKey(0)
    k_emb, k_seq, k_ins = jax.random.split(key, 3)

    B, L = 2, 8          # batch, max sequence length
    N, D = 32, 16        # num items, embedding dim

    item_embeddings = jax.random.normal(k_emb, (N, D), dtype=jnp.float32)
    sequences = jax.random.randint(k_seq, (B, L), 1, N, dtype=jnp.int32)
    seq_lens = jnp.array([8, 5], dtype=jnp.int32)
    # zero out the padded tail like a real padded batch
    sequences = sequences * (jnp.arange(L)[None, :] < seq_lens[:, None])

    out, new_lens, ins_mask, top1 = item_insert_forward(
        sequences, seq_lens, item_embeddings, rng_key=k_ins)
    out = jax.block_until_ready(out)

    # --- check the similarity top-1 kernel (tolerance-aware: compare scores) --
    emb_bf = np.asarray(
        jnp.asarray(item_embeddings).astype(jnp.bfloat16).astype(jnp.float32))
    sims = emb_bf @ emb_bf.T
    np.fill_diagonal(sims, -np.inf)
    top1_np = np.asarray(jax.device_get(top1))
    assert np.all(top1_np != np.arange(N)), "self-similarity not masked"
    kernel_scores = sims[np.arange(N), top1_np]
    ref_scores = sims.max(axis=1)
    assert np.allclose(kernel_scores, ref_scores, rtol=1e-3, atol=1e-3), (
        kernel_scores, ref_scores)

    # --- check the insertion kernel against the PyTorch-style loop ------------
    ref_out, ref_lens = _reference_insert(np.asarray(sequences),
                                          np.asarray(seq_lens),
                                          np.asarray(jax.device_get(ins_mask)),
                                          top1_np)
    assert np.array_equal(np.asarray(out), ref_out), (np.asarray(out), ref_out)
    assert np.array_equal(np.asarray(new_lens), ref_lens), (new_lens, ref_lens)
    print("KERNEL_OK")
</pallas_src>

<mosaic_0001>
module attributes {stable_mosaic.version = 11 : i64} {
  func.func @_top1_sim_kernel(%arg0: i32, %arg1: i32, %arg2: memref<128x16xbf16, #tpu.memory_space<vmem>>, %arg3: memref<16x128xbf16, #tpu.memory_space<vmem>>, %arg4: memref<128x1xi32, #tpu.memory_space<vmem>>, %arg5: memref<128x128xf32, #tpu.memory_space<vmem>>, %arg6: memref<128x128xi32, #tpu.memory_space<vmem>>) attributes {dimension_semantics = [#tpu.dimension_semantics<parallel>, #tpu.dimension_semantics<arbitrary>], iteration_bounds = array<i64: 1, 1>, scalar_prefetch = 0 : i64, scratch_operands = 2 : i64, tpu.core_type = #tpu.core_type<tc>, window_params = [{transform_indices = @transform_0, window_bounds = array<i64: 128, 16>}, {transform_indices = @transform_1, window_bounds = array<i64: 16, 128>}, {transform_indices = @transform_2, window_bounds = array<i64: 128, 1>}]} {
    %c0_i32 = arith.constant 0 : i32
    %0 = arith.cmpi eq, %arg1, %c0_i32 : i32
    %1 = arith.extui %0 : i1 to i32
    %c0_i32_0 = arith.constant 0 : i32
    %2 = arith.cmpi ne, %1, %c0_i32_0 : i32
    scf.if %2 {
      %cst_13 = arith.constant 0xFF800000 : f32
      %28 = vector.broadcast %cst_13 : f32 to vector<128x128xf32>
      %c0_14 = arith.constant 0 : index
      %c0_15 = arith.constant 0 : index
      %29 = vector.load %arg5[%c0_14, %c0_15] : memref<128x128xf32, #tpu.memory_space<vmem>>, vector<128x128xf32>
      tpu.vector_store %arg5[%c0_14, %c0_15], %28 {strides = array<i32>} : memref<128x128xf32, #tpu.memory_space<vmem>>, vector<128x128xf32>,
      %c0_i32_16 = arith.constant 0 : i32
      %30 = vector.broadcast %c0_i32_16 : i32 to vector<128x128xi32>
      %c0_17 = arith.constant 0 : index
      %c0_18 = arith.constant 0 : index
      %31 = vector.load %arg6[%c0_17, %c0_18] : memref<128x128xi32, #tpu.memory_space<vmem>>, vector<128x128xi32>
      tpu.vector_store %arg6[%c0_17, %c0_18], %30 {strides = array<i32>} : memref<128x128xi32, #tpu.memory_space<vmem>>, vector<128x128xi32>,
    } else {
    }
    %c0 = arith.constant 0 : index
    %c0_1 = arith.constant 0 : index
    %3 = vector.load %arg2[%c0, %c0_1] : memref<128x16xbf16, #tpu.memory_space<vmem>>, vector<128x16xbf16>
    %c0_2 = arith.constant 0 : index
    %c0_3 = arith.constant 0 : index
    %4 = vector.load %arg3[%c0_2, %c0_3] : memref<16x128xbf16, #tpu.memory_space<vmem>>, vector<16x128xbf16>
    %cst = arith.constant dense<0.000000e+00> : vector<128x128xf32>
    %5 = tpu.matmul %3, %4, %cst {dimension_numbers = #tpu.dot_dimension_numbers<[1], [0], [0], [1], [0, 0, 1, 1], [], []>} : vector<128x16xbf16>, vector<16x128xbf16>, vector<128x128xf32> -> vector<128x128xf32>
    %c128_i32 = arith.constant 128 : i32
    %6 = arith.muli %arg1, %c128_i32 : i32
    %7 = tpu.iota {dimensions = array<i32: 1>} : vector<128x128xi32>
    %8 = vector.broadcast %6 : i32 to vector<128x128xi32>
    %9 = arith.addi %8, %7 : vector<128x128xi32>
    %c128_i32_4 = arith.constant 128 : i32
    %10 = arith.muli %arg0, %c128_i32_4 : i32
    %c128_i32_5 = arith.constant 128 : i32
    %11 = arith.muli %arg1, %c128_i32_5 : i32
    %c128_i32_6 = arith.constant 128 : i32
    %12 = arith.addi %10, %c128_i32_6 : i32
    %13 = arith.cmpi slt, %11, %12 : i32
    %c128_i32_7 = arith.constant 128 : i32
    %14 = arith.addi %11, %c128_i32_7 : i32
    %15 = arith.cmpi slt, %10, %14 : i32
    %16 = arith.andi %13, %15 : i1
    %c128_i32_8 = arith.constant 128 : i32
    %17 = arith.addi %11, %c128_i32_8 : i32
    %c32_i32 = arith.constant 32 : i32
    %18 = arith.cmpi sgt, %17, %c32_i32 : i32
    %19 = arith.ori %16, %18 : i1
    %20 = arith.extui %19 : i1 to i32
    %c0_i32_9 = arith.constant 0 : i32
    %21 = arith.cmpi ne, %20, %c0_i32_9 : i32
    scf.if %21 {
      %28 = tpu.iota {dimensions = array<i32: 0>} : vector<128x128xi32>
      %29 = vector.broadcast %10 : i32 to vector<128x128xi32>
      %30 = arith.addi %29, %28 : vector<128x128xi32>
      %31 = arith.cmpi eq, %9, %30 : vector<128x128xi32>
      %c32_i32_13 = arith.constant 32 : i32
      %32 = vector.broadcast %c32_i32_13 : i32 to vector<128x128xi32>
      %33 = arith.cmpi sge, %9, %32 : vector<128x128xi32>
      %34 = arith.ori %31, %33 : vector<128x128xi1>
      %cst_14 = arith.constant 0xFF800000 : f32
      %35 = vector.broadcast %cst_14 : f32 to vector<128x128xf32>
      %36 = arith.select %34, %35, %5 : vector<128x128xi1>, vector<128x128xf32>
      %c0_15 = arith.constant 0 : index
      %c0_16 = arith.constant 0 : index
      %37 = vector.load %arg5[%c0_15, %c0_16] : memref<128x128xf32, #tpu.memory_space<vmem>>, vector<128x128xf32>
      %38 = arith.cmpf ogt, %36, %37 : vector<128x128xf32>
      %c0_17 = arith.constant 0 : index
      %c0_18 = arith.constant 0 : index
      %39 = vector.load %arg6[%c0_17, %c0_18] : memref<128x128xi32, #tpu.memory_space<vmem>>, vector<128x128xi32>
      %40 = arith.select %38, %9, %39 : vector<128x128xi1>, vector<128x128xi32>
      %c0_19 = arith.constant 0 : index
      %c0_20 = arith.constant 0 : index
      %41 = vector.load %arg6[%c0_19, %c0_20] : memref<128x128xi32, #tpu.memory_space<vmem>>, vector<128x128xi32>
      tpu.vector_store %arg6[%c0_19, %c0_20], %40 {strides = array<i32>} : memref<128x128xi32, #tpu.memory_space<vmem>>, vector<128x128xi32>,
      %c0_21 = arith.constant 0 : index
      %c0_22 = arith.constant 0 : index
      %42 = vector.load %arg5[%c0_21, %c0_22] : memref<128x128xf32, #tpu.memory_space<vmem>>, vector<128x128xf32>
      %43 = arith.select %38, %36, %42 : vector<128x128xi1>, vector<128x128xf32>
      %c0_23 = arith.constant 0 : index
      %c0_24 = arith.constant 0 : index
      %44 = vector.load %arg5[%c0_23, %c0_24] : memref<128x128xf32, #tpu.memory_space<vmem>>, vector<128x128xf32>
      tpu.vector_store %arg5[%c0_23, %c0_24], %43 {strides = array<i32>} : memref<128x128xf32, #tpu.memory_space<vmem>>, vector<128x128xf32>,
    } else {
    }
    %true = arith.constant true
    %22 = arith.xori %19, %true : i1
    %23 = arith.extui %22 : i1 to i32
    %c0_i32_10 = arith.constant 0 : i32
    %24 = arith.cmpi ne, %23, %c0_i32_10 : i32
    scf.if %24 {
      %c0_13 = arith.constant 0 : index
      %c0_14 = arith.constant 0 : index
      %28 = vector.load %arg5[%c0_13, %c0_14] : memref<128x128xf32, #tpu.memory_space<vmem>>, vector<128x128xf32>
      %29 = arith.cmpf ogt, %5, %28 : vector<128x128xf32>
      %c0_15 = arith.constant 0 : index
      %c0_16 = arith.constant 0 : index
      %30 = vector.load %arg6[%c0_15, %c0_16] : memref<128x128xi32, #tpu.memory_space<vmem>>, vector<128x128xi32>
      %31 = arith.select %29, %9, %30 : vector<128x128xi1>, vector<128x128xi32>
      %c0_17 = arith.constant 0 : index
      %c0_18 = arith.constant 0 : index
      %32 = vector.load %arg6[%c0_17, %c0_18] : memref<128x128xi32, #tpu.memory_space<vmem>>, vector<128x128xi32>
      tpu.vector_store %arg6[%c0_17, %c0_18], %31 {strides = array<i32>} : memref<128x128xi32, #tpu.memory_space<vmem>>, vector<128x128xi32>,
      %c0_19 = arith.constant 0 : index
      %c0_20 = arith.constant 0 : index
      %33 = vector.load %arg5[%c0_19, %c0_20] : memref<128x128xf32, #tpu.memory_space<vmem>>, vector<128x128xf32>
      %34 = arith.select %29, %5, %33 : vector<128x128xi1>, vector<128x128xf32>
      %c0_21 = arith.constant 0 : index
      %c0_22 = arith.constant 0 : index
      %35 = vector.load %arg5[%c0_21, %c0_22] : memref<128x128xf32, #tpu.memory_space<vmem>>, vector<128x128xf32>
      tpu.vector_store %arg5[%c0_21, %c0_22], %34 {strides = array<i32>} : memref<128x128xf32, #tpu.memory_space<vmem>>, vector<128x128xf32>,
    } else {
    }
    %c0_i32_11 = arith.constant 0 : i32
    %25 = arith.cmpi eq, %arg1, %c0_i32_11 : i32
    %26 = arith.extui %25 : i1 to i32
    %c0_i32_12 = arith.constant 0 : i32
    %27 = arith.cmpi ne, %26, %c0_i32_12 : i32
    scf.if %27 {
      %c0_13 = arith.constant 0 : index
      %c0_14 = arith.constant 0 : index
      %28 = vector.load %arg5[%c0_13, %c0_14] : memref<128x128xf32, #tpu.memory_space<vmem>>, vector<128x128xf32>
      %cst_15 = arith.constant dense<0xFF800000> : vector<128xf32>
      %29 = vector.multi_reduction <maximumf>, %28, %cst_15 [1] : vector<128x128xf32> to vector<128xf32>
      %30 = vector.shape_cast %29 : vector<128xf32> to vector<128x1xf32>
      %31 = vector.broadcast %30 : vector<128x1xf32> to vector<128x128xf32>
      %32 = arith.cmpf oeq, %28, %31 : vector<128x128xf32>
      %c0_16 = arith.constant 0 : index
      %c0_17 = arith.constant 0 : index
      %33 = vector.load %arg6[%c0_16, %c0_17] : memref<128x128xi32, #tpu.memory_space<vmem>>, vector<128x128xi32>
      %c1073741824_i32 = arith.constant 1073741824 : i32
      %34 = vector.broadcast %c1073741824_i32 : i32 to vector<128x128xi32>
      %35 = arith.select %32, %33, %34 : vector<128x128xi1>, vector<128x128xi32>
      %cst_18 = arith.constant dense<2147483647> : vector<128xi32>
      %36 = vector.multi_reduction <minsi>, %35, %cst_18 [1] : vector<128x128xi32> to vector<128xi32>
      %37 = vector.shape_cast %36 : vector<128xi32> to vector<128x1xi32>
      %c0_19 = arith.constant 0 : index
      %c0_20 = arith.constant 0 : index
      %38 = vector.load %arg4[%c0_19, %c0_20] : memref<128x1xi32, #tpu.memory_space<vmem>>, vector<128x1xi32>
      tpu.vector_store %arg4[%c0_19, %c0_20], %37 {strides = array<i32>} : memref<128x1xi32, #tpu.memory_space<vmem>>, vector<128x1xi32>,
    } else {
    }
    return
  }
  func.func @transform_0(%arg0: i32, %arg1: i32) -> (i32, i32) {
    %c0_i32 = arith.constant 0 : i32
    %c0_i32_0 = arith.constant 0 : i32
    return %arg0, %c0_i32 : i32, i32
  }
  func.func @transform_1(%arg0: i32, %arg1: i32) -> (i32, i32) {
    %c0_i32 = arith.constant 0 : i32
    %c0_i32_0 = arith.constant 0 : i32
    return %c0_i32, %arg1 : i32, i32
  }
  func.func @transform_2(%arg0: i32, %arg1: i32) -> (i32, i32) {
    %c0_i32 = arith.constant 0 : i32
    %c0_i32_0 = arith.constant 0 : i32
    return %arg0, %c0_i32 : i32, i32
  }
}

</mosaic_0001>

<llo_original>
// kernel: tpu_custom_call.1
$region0: #{tpu_custom_call.1}
  #allocation0 [shape = 'u32[]', space=smem, size = 0x4, offset = 0x4, fixed_abs, tag = 'smem constant byte address 0x4 - core index']
  #allocation1 [shape = 'u32[72,128]{1,0:T(1,128)}', space=vmem, size = 0x9000, scoped, tag = 'internal scratch']
  #allocation2 [shape = 'f32[128,128]{1,0:T(8,128)}', space=vmem, size = 0x10000, scoped, tag = 'scratch operand']
  #allocation3 [shape = 's32[128,128]{1,0:T(8,128)}', space=vmem, size = 0x10000, scoped, tag = 'scratch operand']
  %s0 = inlined_call_operand.vmem [shape: bf16[128,16], index: 0, kind: input, shape index: {}]
  %s1 = inlined_call_operand.vmem [shape: bf16[16,128], index: 1, kind: input, shape index: {}]
  %s2 = inlined_call_operand.vmem [shape: s32[128,1], index: 2, kind: output, shape index: {}]
  %s3 = sld [smem:[#allocation0]]
  $region34: #{tpu_custom_call.1} parent=0
    _
  %s5 = ssub.s32 1, %s3
  %s6 = scalar_select 0, %s5, %s3
  // Predicated region
  $region2: #{tpu_custom_call.1} parent=0 // pred_check
    _
  $region3: #{tpu_custom_call.1} parent=0 // pred_check_branch
    %8 = sbr.rel (0) target = $region5
  $region4: #{tpu_custom_call.1} parent=0 // pred_region
    _
  $region5: #{tpu_custom_call.1} parent=0 // pred_fallthru
    _
  // Predicated region
  $region6: #{tpu_custom_call.1} parent=0 // pred_check
    _
  $region7: #{tpu_custom_call.1} parent=0 // pred_check_branch
    %10 = sbr.rel (0) target = $region9
  $region8: #{tpu_custom_call.1} parent=0 // pred_region
    _
  $region9: #{tpu_custom_call.1} parent=0 // pred_fallthru
    _
  %p12 = scmp.eq.s32.totalorder 0, 0
  // Predicated region
  $region10: #{tpu_custom_call.1} parent=0 // pred_check
    %p13 = pneg %p12
  $region11: #{tpu_custom_call.1} parent=0 // pred_check_branch
    %15 = sbr.rel (%p13) target = $region13
  $region12: #{tpu_custom_call.1} parent=0 // pred_region
    %16 = vst [vmem:[#allocation2] sm:$0xff] -inf
    %17 = vst [vmem:[#allocation2 + $0x8] sm:$0xff] -inf
    %18 = vst [vmem:[#allocation2 + $0x10] sm:$0xff] -inf
    %19 = vst [vmem:[#allocation2 + $0x18] sm:$0xff] -inf
    %20 = vst [vmem:[#allocation2 + $0x20] sm:$0xff] -inf
    %21 = vst [vmem:[#allocation2 + $0x28] sm:$0xff] -inf
    %22 = vst [vmem:[#allocation2 + $0x30] sm:$0xff] -inf
    %23 = vst [vmem:[#allocation2 + $0x38] sm:$0xff] -inf
    %24 = vst [vmem:[#allocation2 + $0x40] sm:$0xff] -inf
    %25 = vst [vmem:[#allocation2 + $0x48] sm:$0xff] -inf
    %26 = vst [vmem:[#allocation2 + $0x50] sm:$0xff] -inf
    %27 = vst [vmem:[#allocation2 + $0x58] sm:$0xff] -inf
    %28 = vst [vmem:[#allocation2 + $0x60] sm:$0xff] -inf
    %29 = vst [vmem:[#allocation2 + $0x68] sm:$0xff] -inf
    %30 = vst [vmem:[#allocation2 + $0x70] sm:$0xff] -inf
    %31 = vst [vmem:[#allocation2 + $0x78] sm:$0xff] -inf
    %32 = vst [vmem:[#allocation3] sm:$0xff] 0
    %33 = vst [vmem:[#allocation3 + $0x8] sm:$0xff] 0
    %34 = vst [vmem:[#allocation3 + $0x10] sm:$0xff] 0
    %35 = vst [vmem:[#allocation3 + $0x18] sm:$0xff] 0
    %36 = vst [vmem:[#allocation3 + $0x20] sm:$0xff] 0
    %37 = vst [vmem:[#allocation3 + $0x28] sm:$0xff] 0
    %38 = vst [vmem:[#allocation3 + $0x30] sm:$0xff] 0
    %39 = vst [vmem:[#allocation3 + $0x38] sm:$0xff] 0
    %40 = vst [vmem:[#allocation3 + $0x40] sm:$0xff] 0
    %41 = vst [vmem:[#allocation3 + $0x48] sm:$0xff] 0
    %42 = vst [vmem:[#allocation3 + $0x50] sm:$0xff] 0
    %43 = vst [vmem:[#allocation3 + $0x58] sm:$0xff] 0
    %44 = vst [vmem:[#allocation3 + $0x60] sm:$0xff] 0
    %45 = vst [vmem:[#allocation3 + $0x68] sm:$0xff] 0
    %46 = vst [vmem:[#allocation3 + $0x70] sm:$0xff] 0
    %47 = vst [vmem:[#allocation3 + $0x78] sm:$0xff] 0
  $region13: #{tpu_custom_call.1} parent=0 // pred_fallthru
    _
  %v48 = vld [vmem:[%s0] sm:$0xf]
  %v49 = vld [vmem:[%s0 + $0x4] sm:$0xf]
  %v50 = vld [vmem:[%s0 + $0x8] sm:$0xf]
  %v51 = vld [vmem:[%s0 + $0xc] sm:$0xf]
  %v52 = vld [vmem:[%s0 + $0x10] sm:$0xf]
  %v53 = vld [vmem:[%s0 + $0x14] sm:$0xf]
  %v54 = vld [vmem:[%s0 + $0x18] sm:$0xf]
  %v55 = vld [vmem:[%s0 + $0x1c] sm:$0xf]
  %v56 = vld [vmem:[%s0 + $0x20] sm:$0xf]
  %v57 = vld [vmem:[%s0 + $0x24] sm:$0xf]
  %v58 = vld [vmem:[%s0 + $0x28] sm:$0xf]
  %v59 = vld [vmem:[%s0 + $0x2c] sm:$0xf]
  %v60 = vld [vmem:[%s0 + $0x30] sm:$0xf]
  %v61 = vld [vmem:[%s0 + $0x34] sm:$0xf]
  %v62 = vld [vmem:[%s0 + $0x38] sm:$0xf]
  %v63 = vld [vmem:[%s0 + $0x3c] sm:$0xf]
  %v64 = vld [vmem:[%s1] sm:$0xf]
  %v65 = vld [vmem:[%s1 + $0x4] sm:$0xf]
  %v82 = vunpack.c.l.b16 %v48
  %v83 = vunpack.c.l.b16 %v49
  %v84 = vunpack.c.l.b16 %v50
  %v85 = vunpack.c.l.b16 %v51
  %v86 = vunpack.c.l.b16 %v52
  %v87 = vunpack.c.l.b16 %v53
  %v88 = vunpack.c.l.b16 %v54
  %v89 = vunpack.c.l.b16 %v55
  %v90 = vunpack.c.l.b16 %v56
  %v91 = vunpack.c.l.b16 %v57
  %v92 = vunpack.c.l.b16 %v58
  %v93 = vunpack.c.l.b16 %v59
  %v94 = vunpack.c.l.b16 %v60
  %v95 = vunpack.c.l.b16 %v61
  %v96 = vunpack.c.l.b16 %v62
  %v97 = vunpack.c.l.b16 %v63
  %v98 = vpack.c.b16 %v83, %v82
  %v99 = vpack.c.b16 %v85, %v84
  %v100 = vpack.c.b16 %v87, %v86
  %v101 = vpack.c.b16 %v89, %v88
  %v102 = vpack.c.b16 %v91, %v90
  %v103 = vpack.c.b16 %v93, %v92
  %v104 = vpack.c.b16 %v95, %v94
  %v105 = vpack.c.b16 %v97, %v96
  %v108 = vunpack.c.l.b16 %v64
  %v109 = vunpack.c.l.b16 %v65
  %v110 = vpack.c.b16 %v109, %v108
  %vm112 = vcmask 130048
  %v114 = vsel %vm112, %v98, 0
  %v117 = vsel %vm112, %v99, 0
  %v120 = vsel %vm112, %v100, 0
  %v123 = vsel %vm112, %v101, 0
  %v126 = vsel %vm112, %v102, 0
  %v129 = vsel %vm112, %v103, 0
  %v132 = vsel %vm112, %v104, 0
  %v135 = vsel %vm112, %v105, 0
  %137 = vmatpush.bf16.msra.mxu0 0
  %138 = vmatpush.bf16.msra.mxu0 0
  %139 = vmatpush.bf16.msra.mxu0 0
  %140 = vmatpush.bf16.msra.mxu0 0
  %141 = vmatpush.bf16.msra.mxu0 0
  %142 = vmatpush.bf16.msra.mxu0 0
  %143 = vmatpush.bf16.msra.mxu0 0
  %144 = vmatpush.bf16.msra.mxu0 %v110
  %145 = vmatmul.bf16.gmra.mxu0 %v114
  %v146 = vpop.f32.mrf.mxu0
  %v147 = vadd.f32 0.0, %v146
  %v148 = vpop.f32.mrf.mxu0
  %v149 = vadd.f32 0.0, %v148
  %150 = vmatmul.bf16.gmra.mxu0 %v117
  %v151 = vpop.f32.mrf.mxu0
  %v152 = vadd.f32 0.0, %v151
  %v153 = vpop.f32.mrf.mxu0
  %v154 = vadd.f32 0.0, %v153
  %155 = vmatmul.bf16.gmra.mxu0 %v120
  %v156 = vpop.f32.mrf.mxu0
  %v157 = vadd.f32 0.0, %v156
  %v158 = vpop.f32.mrf.mxu0
  %v159 = vadd.f32 0.0, %v158
  %160 = vmatmul.bf16.gmra.mxu0 %v123
  %v161 = vpop.f32.mrf.mxu0
  %v162 = vadd.f32 0.0, %v161
  %v163 = vpop.f32.mrf.mxu0
  %v164 = vadd.f32 0.0, %v163
  %165 = vmatmul.bf16.gmra.mxu0 %v126
  %v166 = vpop.f32.mrf.mxu0
  %v167 = vadd.f32 0.0, %v166
  %v168 = vpop.f32.mrf.mxu0
  %v169 = vadd.f32 0.0, %v168
  %170 = vmatmul.bf16.gmra.mxu0 %v129
  %v171 = vpop.f32.mrf.mxu0
  %v172 = vadd.f32 0.0, %v171
  %v173 = vpop.f32.mrf.mxu0
  %v174 = vadd.f32 0.0, %v173
  %175 = vmatmul.bf16.gmra.mxu0 %v132
  %v176 = vpop.f32.mrf.mxu0
  %v177 = vadd.f32 0.0, %v176
  %v178 = vpop.f32.mrf.mxu0
  %v179 = vadd.f32 0.0, %v178
  %180 = vmatmul.bf16.gmra.mxu0 %v135
  %v181 = vpop.f32.mrf.mxu0
  %v182 = vadd.f32 0.0, %v181
  %v183 = vpop.f32.mrf.mxu0
  %v184 = vadd.f32 0.0, %v183
  %185 = vdwg.mxu0
  %s186 = smul.u32 0, 128
  %v187 = vlaneseq
  %v188 = vand.u32 %v187, 127
  %v189 = vstv %s186
  %v190 = vadd.s32 %v189, %v188
  %s191 = smul.u32 0, 128
  %s192 = sadd.s32 %s191, 128
  %p193 = scmp.lt.s32.totalorder %s186, %s192
  %s194 = sadd.s32 %s186, 128
  %p195 = scmp.lt.s32.totalorder %s191, %s194
  %p196 = pnand %p193, %p195
  %p197 = pneg %p196
  %p198 = scmp.gt.s32.totalorder %s194, 32
  %p199 = por %p197, %p198
  // Predicated region
  $region14: #{tpu_custom_call.1} parent=0 // pred_check
    %p200 = pneg %p199
  $region15: #{tpu_custom_call.1} parent=0 // pred_check_branch
    %202 = sbr.rel (%p200) target = $region17
  $region16: #{tpu_custom_call.1} parent=0 // pred_region
    %v203 = vlaneseq
    %v204 = vshrl.u32 %v203, 7
    %v205 = vadd.s32 %v204, 8
    %v206 = vadd.s32 %v204, 16
    %v207 = vadd.s32 %v204, 24
    %v208 = vadd.s32 %v204, 32
    %v209 = vadd.s32 %v204, 40
    %v210 = vadd.s32 %v204, 48
    %v211 = vadd.s32 %v204, 56
    %v212 = vadd.s32 %v204, 64
    %v213 = vadd.s32 %v204, 72
    %v214 = vadd.s32 %v204, 80
    %v215 = vadd.s32 %v204, 88
    %v216 = vadd.s32 %v204, 96
    %v217 = vadd.s32 %v204, 104
    %v218 = vadd.s32 %v204, 112
    %v219 = vadd.s32 %v204, 120
    %v220 = vstv %s191
    %v221 = vadd.s32 %v220, %v204
    %v222 = vadd.s32 %v220, %v205
    %v223 = vadd.s32 %v220, %v206
    %v224 = vadd.s32 %v220, %v207
    %v225 = vadd.s32 %v220, %v208
    %v226 = vadd.s32 %v220, %v209
    %v227 = vadd.s32 %v220, %v210
    %v228 = vadd.s32 %v220, %v211
    %v229 = vadd.s32 %v220, %v212
    %v230 = vadd.s32 %v220, %v213
    %v231 = vadd.s32 %v220, %v214
    %v232 = vadd.s32 %v220, %v215
    %v233 = vadd.s32 %v220, %v216
    %v234 = vadd.s32 %v220, %v217
    %v235 = vadd.s32 %v220, %v218
    %v236 = vadd.s32 %v220, %v219
    %vm237 = vcmp.eq.s32.totalorder %v190, %v221
    %vm238 = vcmp.eq.s32.totalorder %v190, %v222
    %vm239 = vcmp.eq.s32.totalorder %v190, %v223
    %vm240 = vcmp.eq.s32.totalorder %v190, %v224
    %vm241 = vcmp.eq.s32.totalorder %v190, %v225
    %vm242 = vcmp.eq.s32.totalorder %v190, %v226
    %vm243 = vcmp.eq.s32.totalorder %v190, %v227
    %vm244 = vcmp.eq.s32.totalorder %v190, %v228
    %vm245 = vcmp.eq.s32.totalorder %v190, %v229
    %vm246 = vcmp.eq.s32.totalorder %v190, %v230
    %vm247 = vcmp.eq.s32.totalorder %v190, %v231
    %vm248 = vcmp.eq.s32.totalorder %v190, %v232
    %vm249 = vcmp.eq.s32.totalorder %v190, %v233
    %vm250 = vcmp.eq.s32.totalorder %v190, %v234
    %vm251 = vcmp.eq.s32.totalorder %v190, %v235
    %vm252 = vcmp.eq.s32.totalorder %v190, %v236
    %vm253 = vcmp.ge.s32.totalorder %v190, 32
    %vm254 = vmor %vm237, %vm253
    %vm255 = vmor %vm238, %vm253
    %vm256 = vmor %vm239, %vm253
    %vm257 = vmor %vm240, %vm253
    %vm258 = vmor %vm241, %vm253
    %vm259 = vmor %vm242, %vm253
    %vm260 = vmor %vm243, %vm253
    %vm261 = vmor %vm244, %vm253
    %vm262 = vmor %vm245, %vm253
    %vm263 = vmor %vm246, %vm253
    %vm264 = vmor %vm247, %vm253
    %vm265 = vmor %vm248, %vm253
    %vm266 = vmor %vm249, %vm253
    %vm267 = vmor %vm250, %vm253
    %vm268 = vmor %vm251, %vm253
    %vm269 = vmor %vm252, %vm253
    %v270 = vsel %vm254, -inf, %v147
    %v271 = vsel %vm255, -inf, %v149
    %v272 = vsel %vm256, -inf, %v152
    %v273 = vsel %vm257, -inf, %v154
    %v274 = vsel %vm258, -inf, %v157
    %v275 = vsel %vm259, -inf, %v159
    %v276 = vsel %vm260, -inf, %v162
    %v277 = vsel %vm261, -inf, %v164
    %v278 = vsel %vm262, -inf, %v167
    %v279 = vsel %vm263, -inf, %v169
    %v280 = vsel %vm264, -inf, %v172
    %v281 = vsel %vm265, -inf, %v174
    %v282 = vsel %vm266, -inf, %v177
    %v283 = vsel %vm267, -inf, %v179
    %v284 = vsel %vm268, -inf, %v182
    %v285 = vsel %vm269, -inf, %v184
    %v286 = vld [vmem:[#allocation2] sm:$0xff]
    %v287 = vld [vmem:[#allocation2 + $0x8] sm:$0xff]
    %v288 = vld [vmem:[#allocation2 + $0x10] sm:$0xff]
    %v289 = vld [vmem:[#allocation2 + $0x18] sm:$0xff]
    %v290 = vld [vmem:[#allocation2 + $0x20] sm:$0xff]
    %v291 = vld [vmem:[#allocation2 + $0x28] sm:$0xff]
    %v292 = vld [vmem:[#allocation2 + $0x30] sm:$0xff]
    %v293 = vld [vmem:[#allocation2 + $0x38] sm:$0xff]
    %v294 = vld [vmem:[#allocation2 + $0x40] sm:$0xff]
    %v295 = vld [vmem:[#allocation2 + $0x48] sm:$0xff]
    %v296 = vld [vmem:[#allocation2 + $0x50] sm:$0xff]
    %v297 = vld [vmem:[#allocation2 + $0x58] sm:$0xff]
    %v298 = vld [vmem:[#allocation2 + $0x60] sm:$0xff]
    %v299 = vld [vmem:[#allocation2 + $0x68] sm:$0xff]
    %v300 = vld [vmem:[#allocation2 + $0x70] sm:$0xff]
    %v301 = vld [vmem:[#allocation2 + $0x78] sm:$0xff]
    %vm302 = vcmp.gt.f32.partialorder %v270, %v286
    %vm303 = vcmp.gt.f32.partialorder %v271, %v287
    %vm304 = vcmp.gt.f32.partialorder %v272, %v288
    %vm305 = vcmp.gt.f32.partialorder %v273, %v289
    %vm306 = vcmp.gt.f32.partialorder %v274, %v290
    %vm307 = vcmp.gt.f32.partialorder %v275, %v291
    %vm308 = vcmp.gt.f32.partialorder %v276, %v292
    %vm309 = vcmp.gt.f32.partialorder %v277, %v293
    %vm310 = vcmp.gt.f32.partialorder %v278, %v294
    %vm311 = vcmp.gt.f32.partialorder %v279, %v295
    %vm312 = vcmp.gt.f32.partialorder %v280, %v296
    %vm313 = vcmp.gt.f32.partialorder %v281, %v297
    %vm314 = vcmp.gt.f32.partialorder %v282, %v298
    %vm315 = vcmp.gt.f32.partialorder %v283, %v299
    %vm316 = vcmp.gt.f32.partialorder %v284, %v300
    %vm317 = vcmp.gt.f32.partialorder %v285, %v301
    %v318 = vld [vmem:[#allocation3] sm:$0xff]
    %v319 = vld [vmem:[#allocation3 + $0x8] sm:$0xff]
    %v320 = vld [vmem:[#allocation3 + $0x10] sm:$0xff]
    %v321 = vld [vmem:[#allocation3 + $0x18] sm:$0xff]
    %v322 = vld [vmem:[#allocation3 + $0x20] sm:$0xff]
    %v323 = vld [vmem:[#allocation3 + $0x28] sm:$0xff]
    %v324 = vld [vmem:[#allocation3 + $0x30] sm:$0xff]
    %v325 = vld [vmem:[#allocation3 + $0x38] sm:$0xff]
    %v326 = vld [vmem:[#allocation3 + $0x40] sm:$0xff]
    %v327 = vld [vmem:[#allocation3 + $0x48] sm:$0xff]
    %v328 = vld [vmem:[#allocation3 + $0x50] sm:$0xff]
    %v329 = vld [vmem:[#allocation3 + $0x58] sm:$0xff]
    %v330 = vld [vmem:[#allocation3 + $0x60] sm:$0xff]
    %v331 = vld [vmem:[#allocation3 + $0x68] sm:$0xff]
    %v332 = vld [vmem:[#allocation3 + $0x70] sm:$0xff]
    %v333 = vld [vmem:[#allocation3 + $0x78] sm:$0xff]
    %v334 = vsel %vm302, %v190, %v318
    %v335 = vsel %vm303, %v190, %v319
    %v336 = vsel %vm304, %v190, %v320
    %v337 = vsel %vm305, %v190, %v321
    %v338 = vsel %vm306, %v190, %v322
    %v339 = vsel %vm307, %v190, %v323
    %v340 = vsel %vm308, %v190, %v324
    %v341 = vsel %vm309, %v190, %v325
    %v342 = vsel %vm310, %v190, %v326
    %v343 = vsel %vm311, %v190, %v327
    %v344 = vsel %vm312, %v190, %v328
    %v345 = vsel %vm313, %v190, %v329
    %v346 = vsel %vm314, %v190, %v330
    %v347 = vsel %vm315, %v190, %v331
    %v348 = vsel %vm316, %v190, %v332
    %v349 = vsel %vm317, %v190, %v333
    %350 = vst [vmem:[#allocation3] sm:$0xff] %v334
    %351 = vst [vmem:[#allocation3 + $0x8] sm:$0xff] %v335
    %352 = vst [vmem:[#allocation3 + $0x10] sm:$0xff] %v336
    %353 = vst [vmem:[#allocation3 + $0x18] sm:$0xff] %v337
    %354 = vst [vmem:[#allocation3 + $0x20] sm:$0xff] %v338
    %355 = vst [vmem:[#allocation3 + $0x28] sm:$0xff] %v339
    %356 = vst [vmem:[#allocation3 + $0x30] sm:$0xff] %v340
    %357 = vst [vmem:[#allocation3 + $0x38] sm:$0xff] %v341
    %358 = vst [vmem:[#allocation3 + $0x40] sm:$0xff] %v342
    %359 = vst [vmem:[#allocation3 + $0x48] sm:$0xff] %v343
    %360 = vst [vmem:[#allocation3 + $0x50] sm:$0xff] %v344
    %361 = vst [vmem:[#allocation3 + $0x58] sm:$0xff] %v345
    %362 = vst [vmem:[#allocation3 + $0x60] sm:$0xff] %v346
    %363 = vst [vmem:[#allocation3 + $0x68] sm:$0xff] %v347
    %364 = vst [vmem:[#allocation3 + $0x70] sm:$0xff] %v348
    %365 = vst [vmem:[#allocation3 + $0x78] sm:$0xff] %v349
    %v366 = vld [vmem:[#allocation2] sm:$0xff]
    %v367 = vld [vmem:[#allocation2 + $0x8] sm:$0xff]
    %v368 = vld [vmem:[#allocation2 + $0x10] sm:$0xff]
    %v369 = vld [vmem:[#allocation2 + $0x18] sm:$0xff]
    %v370 = vld [vmem:[#allocation2 + $0x20] sm:$0xff]
    %v371 = vld [vmem:[#allocation2 + $0x28] sm:$0xff]
    %v372 = vld [vmem:[#allocation2 + $0x30] sm:$0xff]
    %v373 = vld [vmem:[#allocation2 + $0x38] sm:$0xff]
    %v374 = vld [vmem:[#allocation2 + $0x40] sm:$0xff]
    %v375 = vld [vmem:[#allocation2 + $0x48] sm:$0xff]
    %v376 = vld [vmem:[#allocation2 + $0x50] sm:$0xff]
    %v377 = vld [vmem:[#allocation2 + $0x58] sm:$0xff]
    %v378 = vld [vmem:[#allocation2 + $0x60] sm:$0xff]
    %v379 = vld [vmem:[#allocation2 + $0x68] sm:$0xff]
    %v380 = vld [vmem:[#allocation2 + $0x70] sm:$0xff]
    %v381 = vld [vmem:[#allocation2 + $0x78] sm:$0xff]
    %v382 = vsel %vm302, %v270, %v366
    %v383 = vsel %vm303, %v271, %v367
    %v384 = vsel %vm304, %v272, %v368
    %v385 = vsel %vm305, %v273, %v369
    %v386 = vsel %vm306, %v274, %v370
    %v387 = vsel %vm307, %v275, %v371
    %v388 = vsel %vm308, %v276, %v372
    %v389 = vsel %vm309, %v277, %v373
    %v390 = vsel %vm310, %v278, %v374
    %v391 = vsel %vm311, %v279, %v375
    %v392 = vsel %vm312, %v280, %v376
    %v393 = vsel %vm313, %v281, %v377
    %v394 = vsel %vm314, %v282, %v378
    %v395 = vsel %vm315, %v283, %v379
    %v396 = vsel %vm316, %v284, %v380
    %v397 = vsel %vm317, %v285, %v381
    %398 = vst [vmem:[#allocation2] sm:$0xff] %v382
    %399 = vst [vmem:[#allocation2 + $0x8] sm:$0xff] %v383
    %400 = vst [vmem:[#allocation2 + $0x10] sm:$0xff] %v384
    %401 = vst [vmem:[#allocation2 + $0x18] sm:$0xff] %v385
    %402 = vst [vmem:[#allocation2 + $0x20] sm:$0xff] %v386
    %403 = vst [vmem:[#allocation2 + $0x28] sm:$0xff] %v387
    %404 = vst [vmem:[#allocation2 + $0x30] sm:$0xff] %v388
    %405 = vst [vmem:[#allocation2 + $0x38] sm:$0xff] %v389
    %406 = vst [vmem:[#allocation2 + $0x40] sm:$0xff] %v390
    %407 = vst [vmem:[#allocation2 + $0x48] sm:$0xff] %v391
    %408 = vst [vmem:[#allocation2 + $0x50] sm:$0xff] %v392
    %409 = vst [vmem:[#allocation2 + $0x58] sm:$0xff] %v393
    %410 = vst [vmem:[#allocation2 + $0x60] sm:$0xff] %v394
    %411 = vst [vmem:[#allocation2 + $0x68] sm:$0xff] %v395
    %412 = vst [vmem:[#allocation2 + $0x70] sm:$0xff] %v396
    %413 = vst [vmem:[#allocation2 + $0x78] sm:$0xff] %v397
  $region17: #{tpu_custom_call.1} parent=0 // pred_fallthru
    _
  %p414 = pneg %p199
  // Predicated region
  $region18: #{tpu_custom_call.1} parent=0 // pred_check
    _
  $region19: #{tpu_custom_call.1} parent=0 // pred_check_branch
    %416 = sbr.rel (%p199) target = $region21
  $region20: #{tpu_custom_call.1} parent=0 // pred_region
    %v417 = vld [vmem:[#allocation2] sm:$0xff]
    %v418 = vld [vmem:[#allocation2 + $0x8] sm:$0xff]
    %v419 = vld [vmem:[#allocation2 + $0x10] sm:$0xff]
    %v420 = vld [vmem:[#allocation2 + $0x18] sm:$0xff]
    %v421 = vld [vmem:[#allocation2 + $0x20] sm:$0xff]
    %v422 = vld [vmem:[#allocation2 + $0x28] sm:$0xff]
    %v423 = vld [vmem:[#allocation2 + $0x30] sm:$0xff]
    %v424 = vld [vmem:[#allocation2 + $0x38] sm:$0xff]
    %v425 = vld [vmem:[#allocation2 + $0x40] sm:$0xff]
    %v426 = vld [vmem:[#allocation2 + $0x48] sm:$0xff]
    %v427 = vld [vmem:[#allocation2 + $0x50] sm:$0xff]
    %v428 = vld [vmem:[#allocation2 + $0x58] sm:$0xff]
    %v429 = vld [vmem:[#allocation2 + $0x60] sm:$0xff]
    %v430 = vld [vmem:[#allocation2 + $0x68] sm:$0xff]
    %v431 = vld [vmem:[#allocation2 + $0x70] sm:$0xff]
    %v432 = vld [vmem:[#allocation2 + $0x78] sm:$0xff]
    %vm433 = vcmp.gt.f32.partialorder %v147, %v417
    %vm434 = vcmp.gt.f32.partialorder %v149, %v418
    %vm435 = vcmp.gt.f32.partialorder %v152, %v419
    %vm436 = vcmp.gt.f32.partialorder %v154, %v420
    %vm437 = vcmp.gt.f32.partialorder %v157, %v421
    %vm438 = vcmp.gt.f32.partialorder %v159, %v422
    %vm439 = vcmp.gt.f32.partialorder %v162, %v423
    %vm440 = vcmp.gt.f32.partialorder %v164, %v424
    %vm441 = vcmp.gt.f32.partialorder %v167, %v425
    %vm442 = vcmp.gt.f32.partialorder %v169, %v426
    %vm443 = vcmp.gt.f32.partialorder %v172, %v427
    %vm444 = vcmp.gt.f32.partialorder %v174, %v428
    %vm445 = vcmp.gt.f32.partialorder %v177, %v429
    %vm446 = vcmp.gt.f32.partialorder %v179, %v430
    %vm447 = vcmp.gt.f32.partialorder %v182, %v431
    %vm448 = vcmp.gt.f32.partialorder %v184, %v432
    %v449 = vld [vmem:[#allocation3] sm:$0xff]
    %v450 = vld [vmem:[#allocation3 + $0x8] sm:$0xff]
    %v451 = vld [vmem:[#allocation3 + $0x10] sm:$0xff]
    %v452 = vld [vmem:[#allocation3 + $0x18] sm:$0xff]
    %v453 = vld [vmem:[#allocation3 + $0x20] sm:$0xff]
    %v454 = vld [vmem:[#allocation3 + $0x28] sm:$0xff]
    %v455 = vld [vmem:[#allocation3 + $0x30] sm:$0xff]
    %v456 = vld [vmem:[#allocation3 + $0x38] sm:$0xff]
    %v457 = vld [vmem:[#allocation3 + $0x40] sm:$0xff]
    %v458 = vld [vmem:[#allocation3 + $0x48] sm:$0xff]
    %v459 = vld [vmem:[#allocation3 + $0x50] sm:$0xff]
    %v460 = vld [vmem:[#allocation3 + $0x58] sm:$0xff]
    %v461 = vld [vmem:[#allocation3 + $0x60] sm:$0xff]
    %v462 = vld [vmem:[#allocation3 + $0x68] sm:$0xff]
    %v463 = vld [vmem:[#allocation3 + $0x70] sm:$0xff]
    %v464 = vld [vmem:[#allocation3 + $0x78] sm:$0xff]
    %v465 = vsel %vm433, %v190, %v449
    %v466 = vsel %vm434, %v190, %v450
    %v467 = vsel %vm435, %v190, %v451
    %v468 = vsel %vm436, %v190, %v452
    %v469 = vsel %vm437, %v190, %v453
    %v470 = vsel %vm438, %v190, %v454
    %v471 = vsel %vm439, %v190, %v455
    %v472 = vsel %vm440, %v190, %v456
    %v473 = vsel %vm441, %v190, %v457
    %v474 = vsel %vm442, %v190, %v458
    %v475 = vsel %vm443, %v190, %v459
    %v476 = vsel %vm444, %v190, %v460
    %v477 = vsel %vm445, %v190, %v461
    %v478 = vsel %vm446, %v190, %v462
    %v479 = vsel %vm447, %v190, %v463
    %v480 = vsel %vm448, %v190, %v464
    %481 = vst [vmem:[#allocation3] sm:$0xff] %v465
    %482 = vst [vmem:[#allocation3 + $0x8] sm:$0xff] %v466
    %483 = vst [vmem:[#allocation3 + $0x10] sm:$0xff] %v467
    %484 = vst [vmem:[#allocation3 + $0x18] sm:$0xff] %v468
    %485 = vst [vmem:[#allocation3 + $0x20] sm:$0xff] %v469
    %486 = vst [vmem:[#allocation3 + $0x28] sm:$0xff] %v470
    %487 = vst [vmem:[#allocation3 + $0x30] sm:$0xff] %v471
    %488 = vst [vmem:[#allocation3 + $0x38] sm:$0xff] %v472
    %489 = vst [vmem:[#allocation3 + $0x40] sm:$0xff] %v473
    %490 = vst [vmem:[#allocation3 + $0x48] sm:$0xff] %v474
    %491 = vst [vmem:[#allocation3 + $0x50] sm:$0xff] %v475
    %492 = vst [vmem:[#allocation3 + $0x58] sm:$0xff] %v476
    %493 = vst [vmem:[#allocation3 + $0x60] sm:$0xff] %v477
    %494 = vst [vmem:[#allocation3 + $0x68] sm:$0xff] %v478
    %495 = vst [vmem:[#allocation3 + $0x70] sm:$0xff] %v479
    %496 = vst [vmem:[#allocation3 + $0x78] sm:$0xff] %v480
    %v497 = vld [vmem:[#allocation2] sm:$0xff]
    %v498 = vld [vmem:[#allocation2 + $0x8] sm:$0xff]
    %v499 = vld [vmem:[#allocation2 + $0x10] sm:$0xff]
    %v500 = vld [vmem:[#allocation2 + $0x18] sm:$0xff]
    %v501 = vld [vmem:[#allocation2 + $0x20] sm:$0xff]
    %v502 = vld [vmem:[#allocation2 + $0x28] sm:$0xff]
    %v503 = vld [vmem:[#allocation2 + $0x30] sm:$0xff]
    %v504 = vld [vmem:[#allocation2 + $0x38] sm:$0xff]
    %v505 = vld [vmem:[#allocation2 + $0x40] sm:$0xff]
    %v506 = vld [vmem:[#allocation2 + $0x48] sm:$0xff]
    %v507 = vld [vmem:[#allocation2 + $0x50] sm:$0xff]
    %v508 = vld [vmem:[#allocation2 + $0x58] sm:$0xff]
    %v509 = vld [vmem:[#allocation2 + $0x60] sm:$0xff]
    %v510 = vld [vmem:[#allocation2 + $0x68] sm:$0xff]
    %v511 = vld [vmem:[#allocation2 + $0x70] sm:$0xff]
    %v512 = vld [vmem:[#allocation2 + $0x78] sm:$0xff]
    %v513 = vsel %vm433, %v147, %v497
    %v514 = vsel %vm434, %v149, %v498
    %v515 = vsel %vm435, %v152, %v499
    %v516 = vsel %vm436, %v154, %v500
    %v517 = vsel %vm437, %v157, %v501
    %v518 = vsel %vm438, %v159, %v502
    %v519 = vsel %vm439, %v162, %v503
    %v520 = vsel %vm440, %v164, %v504
    %v521 = vsel %vm441, %v167, %v505
    %v522 = vsel %vm442, %v169, %v506
    %v523 = vsel %vm443, %v172, %v507
    %v524 = vsel %vm444, %v174, %v508
    %v525 = vsel %vm445, %v177, %v509
    %v526 = vsel %vm446, %v179, %v510
    %v527 = vsel %vm447, %v182, %v511
    %v528 = vsel %vm448, %v184, %v512
    %529 = vst [vmem:[#allocation2] sm:$0xff] %v513
    %530 = vst [vmem:[#allocation2 + $0x8] sm:$0xff] %v514
    %531 = vst [vmem:[#allocation2 + $0x10] sm:$0xff] %v515
    %532 = vst [vmem:[#allocation2 + $0x18] sm:$0xff] %v516
    %533 = vst [vmem:[#allocation2 + $0x20] sm:$0xff] %v517
    %534 = vst [vmem:[#allocation2 + $0x28] sm:$0xff] %v518
    %535 = vst [vmem:[#allocation2 + $0x30] sm:$0xff] %v519
    %536 = vst [vmem:[#allocation2 + $0x38] sm:$0xff] %v520
    %537 = vst [vmem:[#allocation2 + $0x40] sm:$0xff] %v521
    %538 = vst [vmem:[#allocation2 + $0x48] sm:$0xff] %v522
    %539 = vst [vmem:[#allocation2 + $0x50] sm:$0xff] %v523
    %540 = vst [vmem:[#allocation2 + $0x58] sm:$0xff] %v524
    %541 = vst [vmem:[#allocation2 + $0x60] sm:$0xff] %v525
    %542 = vst [vmem:[#allocation2 + $0x68] sm:$0xff] %v526
    %543 = vst [vmem:[#allocation2 + $0x70] sm:$0xff] %v527
    %544 = vst [vmem:[#allocation2 + $0x78] sm:$0xff] %v528
  $region21: #{tpu_custom_call.1} parent=0 // pred_fallthru
    _
  // Predicated region
  $region22: #{tpu_custom_call.1} parent=0 // pred_check
    %p545 = pneg %p12
  $region23: #{tpu_custom_call.1} parent=0 // pred_check_branch
    %547 = sbr.rel (%p545) target = $region25
  $region24: #{tpu_custom_call.1} parent=0 // pred_region
    %v548 = vld [vmem:[#allocation2] sm:$0xff]
    %v549 = vld [vmem:[#allocation2 + $0x8] sm:$0xff]
    %v550 = vld [vmem:[#allocation2 + $0x10] sm:$0xff]
    %v551 = vld [vmem:[#allocation2 + $0x18] sm:$0xff]
    %v552 = vld [vmem:[#allocation2 + $0x20] sm:$0xff]
    %v553 = vld [vmem:[#allocation2 + $0x28] sm:$0xff]
    %v554 = vld [vmem:[#allocation2 + $0x30] sm:$0xff]
    %v555 = vld [vmem:[#allocation2 + $0x38] sm:$0xff]
    %v556 = vld [vmem:[#allocation2 + $0x40] sm:$0xff]
    %v557 = vld [vmem:[#allocation2 + $0x48] sm:$0xff]
    %v558 = vld [vmem:[#allocation2 + $0x50] sm:$0xff]
    %v559 = vld [vmem:[#allocation2 + $0x58] sm:$0xff]
    %v560 = vld [vmem:[#allocation2 + $0x60] sm:$0xff]
    %v561 = vld [vmem:[#allocation2 + $0x68] sm:$0xff]
    %v562 = vld [vmem:[#allocation2 + $0x70] sm:$0xff]
    %v563 = vld [vmem:[#allocation2 + $0x78] sm:$0xff]
    %564 = vmax.xlane.f32.xlu0 %v548
    %v565 = vpop.xlane.xlu0 %564
    %566 = vmax.xlane.f32.xlu0 %v549
    %v567 = vpop.xlane.xlu0 %566
    %568 = vmax.xlane.f32.xlu0 %v550
    %v569 = vpop.xlane.xlu0 %568
    %570 = vmax.xlane.f32.xlu0 %v551
    %v571 = vpop.xlane.xlu0 %570
    %572 = vmax.xlane.f32.xlu0 %v552
    %v573 = vpop.xlane.xlu0 %572
    %574 = vmax.xlane.f32.xlu0 %v553
    %v575 = vpop.xlane.xlu0 %574
    %576 = vmax.xlane.f32.xlu0 %v554
    %v577 = vpop.xlane.xlu0 %576
    %578 = vmax.xlane.f32.xlu0 %v555
    %v579 = vpop.xlane.xlu0 %578
    %580 = vmax.xlane.f32.xlu0 %v556
    %v581 = vpop.xlane.xlu0 %580
    %582 = vmax.xlane.f32.xlu0 %v557
    %v583 = vpop.xlane.xlu0 %582
    %584 = vmax.xlane.f32.xlu0 %v558
    %v585 = vpop.xlane.xlu0 %584
    %586 = vmax.xlane.f32.xlu0 %v559
    %v587 = vpop.xlane.xlu0 %586
    %588 = vmax.xlane.f32.xlu0 %v560
    %v589 = vpop.xlane.xlu0 %588
    %590 = vmax.xlane.f32.xlu0 %v561
    %v591 = vpop.xlane.xlu0 %590
    %592 = vmax.xlane.f32.xlu0 %v562
    %v593 = vpop.xlane.xlu0 %592
    %594 = vmax.xlane.f32.xlu0 %v563
    %v595 = vpop.xlane.xlu0 %594
    %vm596 = vcmp.eq.f32.partialorder %v548, %v565
    %vm597 = vcmp.eq.f32.partialorder %v549, %v567
    %vm598 = vcmp.eq.f32.partialorder %v550, %v569
    %vm599 = vcmp.eq.f32.partialorder %v551, %v571
    %vm600 = vcmp.eq.f32.partialorder %v552, %v573
    %vm601 = vcmp.eq.f32.partialorder %v553, %v575
    %vm602 = vcmp.eq.f32.partialorder %v554, %v577
    %vm603 = vcmp.eq.f32.partialorder %v555, %v579
    %vm604 = vcmp.eq.f32.partialorder %v556, %v581
    %vm605 = vcmp.eq.f32.partialorder %v557, %v583
    %vm606 = vcmp.eq.f32.partialorder %v558, %v585
    %vm607 = vcmp.eq.f32.partialorder %v559, %v587
    %vm608 = vcmp.eq.f32.partialorder %v560, %v589
    %vm609 = vcmp.eq.f32.partialorder %v561, %v591
    %vm610 = vcmp.eq.f32.partialorder %v562, %v593
    %vm611 = vcmp.eq.f32.partialorder %v563, %v595
    %v612 = vld [vmem:[#allocation3] sm:$0xff]
    %v613 = vld [vmem:[#allocation3 + $0x8] sm:$0xff]
    %v614 = vld [vmem:[#allocation3 + $0x10] sm:$0xff]
    %v615 = vld [vmem:[#allocation3 + $0x18] sm:$0xff]
    %v616 = vld [vmem:[#allocation3 + $0x20] sm:$0xff]
    %v617 = vld [vmem:[#allocation3 + $0x28] sm:$0xff]
    %v618 = vld [vmem:[#allocation3 + $0x30] sm:$0xff]
    %v619 = vld [vmem:[#allocation3 + $0x38] sm:$0xff]
    %v620 = vld [vmem:[#allocation3 + $0x40] sm:$0xff]
    %v621 = vld [vmem:[#allocation3 + $0x48] sm:$0xff]
    %v622 = vld [vmem:[#allocation3 + $0x50] sm:$0xff]
    %v623 = vld [vmem:[#allocation3 + $0x58] sm:$0xff]
    %v624 = vld [vmem:[#allocation3 + $0x60] sm:$0xff]
    %v625 = vld [vmem:[#allocation3 + $0x68] sm:$0xff]
    %v626 = vld [vmem:[#allocation3 + $0x70] sm:$0xff]
    %v627 = vld [vmem:[#allocation3 + $0x78] sm:$0xff]
    %v628 = vsel %vm596, %v612, 1073741824
    %v629 = vsel %vm597, %v613, 1073741824
    %v630 = vsel %vm598, %v614, 1073741824
    %v631 = vsel %vm599, %v615, 1073741824
    %v632 = vsel %vm600, %v616, 1073741824
    %v633 = vsel %vm601, %v617, 1073741824
    %v634 = vsel %vm602, %v618, 1073741824
    %v635 = vsel %vm603, %v619, 1073741824
    %v636 = vsel %vm604, %v620, 1073741824
    %v637 = vsel %vm605, %v621, 1073741824
    %v638 = vsel %vm606, %v622, 1073741824
    %v639 = vsel %vm607, %v623, 1073741824
    %v640 = vsel %vm608, %v624, 1073741824
    %v641 = vsel %vm609, %v625, 1073741824
    %v642 = vsel %vm610, %v626, 1073741824
    %v643 = vsel %vm611, %v627, 1073741824
    %v644 = vand.u32 %v628, 65535
    %v645 = vshra.s32 %v628, 16
    %v646 = vcvt.s32.f32 %v644
    %v647 = vcvt.s32.f32 %v645
    %648 = vmin.xlane.f32.xlu0 %v647
    %v649 = vpop.xlane.xlu0 %648
    %vm650 = vcmp.eq.f32.partialorder %v647, %v649
    %v651 = vsel %vm650, %v646, inf
    %652 = vmin.xlane.f32.xlu0 %v651
    %v653 = vpop.xlane.xlu0 %652
    %v654 = vcvt.f32.s32 %v653
    %v655 = vcvt.f32.s32 %v649
    %v656 = vshll.u32 %v655, 16
    %v657 = vadd.s32 %v656, %v654
    %v658 = vand.u32 %v629, 65535
    %v659 = vshra.s32 %v629, 16
    %v660 = vcvt.s32.f32 %v658
    %v661 = vcvt.s32.f32 %v659
    %662 = vmin.xlane.f32.xlu0 %v661
    %v663 = vpop.xlane.xlu0 %662
    %vm664 = vcmp.eq.f32.partialorder %v661, %v663
    %v665 = vsel %vm664, %v660, inf
    %666 = vmin.xlane.f32.xlu0 %v665
    %v667 = vpop.xlane.xlu0 %666
    %v668 = vcvt.f32.s32 %v667
    %v669 = vcvt.f32.s32 %v663
    %v670 = vshll.u32 %v669, 16
    %v671 = vadd.s32 %v670, %v668
    %v672 = vand.u32 %v630, 65535
    %v673 = vshra.s32 %v630, 16
    %v674 = vcvt.s32.f32 %v672
    %v675 = vcvt.s32.f32 %v673
    %676 = vmin.xlane.f32.xlu0 %v675
    %v677 = vpop.xlane.xlu0 %676
    %vm678 = vcmp.eq.f32.partialorder %v675, %v677
    %v679 = vsel %vm678, %v674, inf
    %680 = vmin.xlane.f32.xlu0 %v679
    %v681 = vpop.xlane.xlu0 %680
    %v682 = vcvt.f32.s32 %v681
    %v683 = vcvt.f32.s32 %v677
    %v684 = vshll.u32 %v683, 16
    %v685 = vadd.s32 %v684, %v682
    %v686 = vand.u32 %v631, 65535
    %v687 = vshra.s32 %v631, 16
    %v688 = vcvt.s32.f32 %v686
    %v689 = vcvt.s32.f32 %v687
    %690 = vmin.xlane.f32.xlu0 %v689
    %v691 = vpop.xlane.xlu0 %690
    %vm692 = vcmp.eq.f32.partialorder %v689, %v691
    %v693 = vsel %vm692, %v688, inf
    %694 = vmin.xlane.f32.xlu0 %v693
    %v695 = vpop.xlane.xlu0 %694
    %v696 = vcvt.f32.s32 %v695
    %v697 = vcvt.f32.s32 %v691
    %v698 = vshll.u32 %v697, 16
    %v699 = vadd.s32 %v698, %v696
    %v700 = vand.u32 %v632, 65535
    %v701 = vshra.s32 %v632, 16
    %v702 = vcvt.s32.f32 %v700
    %v703 = vcvt.s32.f32 %v701
    %704 = vmin.xlane.f32.xlu0 %v703
    %v705 = vpop.xlane.xlu0 %704
    %vm706 = vcmp.eq.f32.partialorder %v703, %v705
    %v707 = vsel %vm706, %v702, inf
    %708 = vmin.xlane.f32.xlu0 %v707
    %v709 = vpop.xlane.xlu0 %708
    %v710 = vcvt.f32.s32 %v709
    %v711 = vcvt.f32.s32 %v705
    %v712 = vshll.u32 %v711, 16
    %v713 = vadd.s32 %v712, %v710
    %v714 = vand.u32 %v633, 65535
    %v715 = vshra.s32 %v633, 16
    %v716 = vcvt.s32.f32 %v714
    %v717 = vcvt.s32.f32 %v715
    %718 = vmin.xlane.f32.xlu0 %v717
    %v719 = vpop.xlane.xlu0 %718
    %vm720 = vcmp.eq.f32.partialorder %v717, %v719
    %v721 = vsel %vm720, %v716, inf
    %722 = vmin.xlane.f32.xlu0 %v721
    %v723 = vpop.xlane.xlu0 %722
    %v724 = vcvt.f32.s32 %v723
    %v725 = vcvt.f32.s32 %v719
    %v726 = vshll.u32 %v725, 16
    %v727 = vadd.s32 %v726, %v724
    %v728 = vand.u32 %v634, 65535
    %v729 = vshra.s32 %v634, 16
    %v730 = vcvt.s32.f32 %v728
    %v731 = vcvt.s32.f32 %v729
    %732 = vmin.xlane.f32.xlu0 %v731
    %v733 = vpop.xlane.xlu0 %732
    %vm734 = vcmp.eq.f32.partialorder %v731, %v733
    %v735 = vsel %vm734, %v730, inf
    %736 = vmin.xlane.f32.xlu0 %v735
    %v737 = vpop.xlane.xlu0 %736
    %v738 = vcvt.f32.s32 %v737
    %v739 = vcvt.f32.s32 %v733
    %v740 = vshll.u32 %v739, 16
    %v741 = vadd.s32 %v740, %v738
    %v742 = vand.u32 %v635, 65535
    %v743 = vshra.s32 %v635, 16
    %v744 = vcvt.s32.f32 %v742
    %v745 = vcvt.s32.f32 %v743
    %746 = vmin.xlane.f32.xlu0 %v745
    %v747 = vpop.xlane.xlu0 %746
    %vm748 = vcmp.eq.f32.partialorder %v745, %v747
    %v749 = vsel %vm748, %v744, inf
    %750 = vmin.xlane.f32.xlu0 %v749
    %v751 = vpop.xlane.xlu0 %750
    %v752 = vcvt.f32.s32 %v751
    %v753 = vcvt.f32.s32 %v747
    %v754 = vshll.u32 %v753, 16
    %v755 = vadd.s32 %v754, %v752
    %v756 = vand.u32 %v636, 65535
    %v757 = vshra.s32 %v636, 16
    %v758 = vcvt.s32.f32 %v756
    %v759 = vcvt.s32.f32 %v757
    %760 = vmin.xlane.f32.xlu0 %v759
    %v761 = vpop.xlane.xlu0 %760
    %vm762 = vcmp.eq.f32.partialorder %v759, %v761
    %v763 = vsel %vm762, %v758, inf
    %764 = vmin.xlane.f32.xlu0 %v763
    %v765 = vpop.xlane.xlu0 %764
    %v766 = vcvt.f32.s32 %v765
    %v767 = vcvt.f32.s32 %v761
    %v768 = vshll.u32 %v767, 16
    %v769 = vadd.s32 %v768, %v766
    %v770 = vand.u32 %v637, 65535
    %v771 = vshra.s32 %v637, 16
    %v772 = vcvt.s32.f32 %v770
    %v773 = vcvt.s32.f32 %v771
    %774 = vmin.xlane.f32.xlu0 %v773
    %v775 = vpop.xlane.xlu0 %774
    %vm776 = vcmp.eq.f32.partialorder %v773, %v775
    %v777 = vsel %vm776, %v772, inf
    %778 = vmin.xlane.f32.xlu0 %v777
    %v779 = vpop.xlane.xlu0 %778
    %v780 = vcvt.f32.s32 %v779
    %v781 = vcvt.f32.s32 %v775
    %v782 = vshll.u32 %v781, 16
    %v783 = vadd.s32 %v782, %v780
    %v784 = vand.u32 %v638, 65535
    %v785 = vshra.s32 %v638, 16
    %v786 = vcvt.s32.f32 %v784
    %v787 = vcvt.s32.f32 %v785
    %788 = vmin.xlane.f32.xlu0 %v787
    %v789 = vpop.xlane.xlu0 %788
    %vm790 = vcmp.eq.f32.partialorder %v787, %v789
    %v791 = vsel %vm790, %v786, inf
    %792 = vmin.xlane.f32.xlu0 %v791
    %v793 = vpop.xlane.xlu0 %792
    %v794 = vcvt.f32.s32 %v793
    %v795 = vcvt.f32.s32 %v789
    %v796 = vshll.u32 %v795, 16
    %v797 = vadd.s32 %v796, %v794
    %v798 = vand.u32 %v639, 65535
    %v799 = vshra.s32 %v639, 16
    %v800 = vcvt.s32.f32 %v798
    %v801 = vcvt.s32.f32 %v799
    %802 = vmin.xlane.f32.xlu0 %v801
    %v803 = vpop.xlane.xlu0 %802
    %vm804 = vcmp.eq.f32.partialorder %v801, %v803
    %v805 = vsel %vm804, %v800, inf
    %806 = vmin.xlane.f32.xlu0 %v805
    %v807 = vpop.xlane.xlu0 %806
    %v808 = vcvt.f32.s32 %v807
    %v809 = vcvt.f32.s32 %v803
    %v810 = vshll.u32 %v809, 16
    %v811 = vadd.s32 %v810, %v808
    %v812 = vand.u32 %v640, 65535
    %v813 = vshra.s32 %v640, 16
    %v814 = vcvt.s32.f32 %v812
    %v815 = vcvt.s32.f32 %v813
    %816 = vmin.xlane.f32.xlu0 %v815
    %v817 = vpop.xlane.xlu0 %816
    %vm818 = vcmp.eq.f32.partialorder %v815, %v817
    %v819 = vsel %vm818, %v814, inf
    %820 = vmin.xlane.f32.xlu0 %v819
    %v821 = vpop.xlane.xlu0 %820
    %v822 = vcvt.f32.s32 %v821
    %v823 = vcvt.f32.s32 %v817
    %v824 = vshll.u32 %v823, 16
    %v825 = vadd.s32 %v824, %v822
    %v826 = vand.u32 %v641, 65535
    %v827 = vshra.s32 %v641, 16
    %v828 = vcvt.s32.f32 %v826
    %v829 = vcvt.s32.f32 %v827
    %830 = vmin.xlane.f32.xlu0 %v829
    %v831 = vpop.xlane.xlu0 %830
    %vm832 = vcmp.eq.f32.partialorder %v829, %v831
    %v833 = vsel %vm832, %v828, inf
    %834 = vmin.xlane.f32.xlu0 %v833
    %v835 = vpop.xlane.xlu0 %834
    %v836 = vcvt.f32.s32 %v835
    %v837 = vcvt.f32.s32 %v831
    %v838 = vshll.u32 %v837, 16
    %v839 = vadd.s32 %v838, %v836
    %v840 = vand.u32 %v642, 65535
    %v841 = vshra.s32 %v642, 16
    %v842 = vcvt.s32.f32 %v840
    %v843 = vcvt.s32.f32 %v841
    %844 = vmin.xlane.f32.xlu0 %v843
    %v845 = vpop.xlane.xlu0 %844
    %vm846 = vcmp.eq.f32.partialorder %v843, %v845
    %v847 = vsel %vm846, %v842, inf
    %848 = vmin.xlane.f32.xlu0 %v847
    %v849 = vpop.xlane.xlu0 %848
    %v850 = vcvt.f32.s32 %v849
    %v851 = vcvt.f32.s32 %v845
    %v852 = vshll.u32 %v851, 16
    %v853 = vadd.s32 %v852, %v850
    %v854 = vand.u32 %v643, 65535
    %v855 = vshra.s32 %v643, 16
    %v856 = vcvt.s32.f32 %v854
    %v857 = vcvt.s32.f32 %v855
    %858 = vmin.xlane.f32.xlu0 %v857
    %v859 = vpop.xlane.xlu0 %858
    %vm860 = vcmp.eq.f32.partialorder %v857, %v859
    %v861 = vsel %vm860, %v856, inf
    %862 = vmin.xlane.f32.xlu0 %v861
    %v863 = vpop.xlane.xlu0 %862
    %v864 = vcvt.f32.s32 %v863
    %v865 = vcvt.f32.s32 %v859
    %v866 = vshll.u32 %v865, 16
    %v867 = vadd.s32 %v866, %v864
    %vm868 = vcmask 7168
    %869 = vst.msk [vmem:[%s2] sm:$0xff] %vm868, %v657
    %870 = vst.msk [vmem:[%s2 + $0x8] sm:$0xff] %vm868, %v671
    %871 = vst.msk [vmem:[%s2 + $0x10] sm:$0xff] %vm868, %v685
    %872 = vst.msk [vmem:[%s2 + $0x18] sm:$0xff] %vm868, %v699
    %873 = vst.msk [vmem:[%s2 + $0x20] sm:$0xff] %vm868, %v713
    %874 = vst.msk [vmem:[%s2 + $0x28] sm:$0xff] %vm868, %v727
    %875 = vst.msk [vmem:[%s2 + $0x30] sm:$0xff] %vm868, %v741
    %876 = vst.msk [vmem:[%s2 + $0x38] sm:$0xff] %vm868, %v755
    %877 = vst.msk [vmem:[%s2 + $0x40] sm:$0xff] %vm868, %v769
    %878 = vst.msk [vmem:[%s2 + $0x48] sm:$0xff] %vm868, %v783
    %879 = vst.msk [vmem:[%s2 + $0x50] sm:$0xff] %vm868, %v797
    %880 = vst.msk [vmem:[%s2 + $0x58] sm:$0xff] %vm868, %v811
    %881 = vst.msk [vmem:[%s2 + $0x60] sm:$0xff] %vm868, %v825
    %882 = vst.msk [vmem:[%s2 + $0x68] sm:$0xff] %vm868, %v839
    %883 = vst.msk [vmem:[%s2 + $0x70] sm:$0xff] %vm868, %v853
    %884 = vst.msk [vmem:[%s2 + $0x78] sm:$0xff] %vm868, %v867
  $region25: #{tpu_custom_call.1} parent=0 // pred_fallthru
    _
  // Predicated region
  $region26: #{tpu_custom_call.1} parent=0 // pred_check
    _
  $region27: #{tpu_custom_call.1} parent=0 // pred_check_branch
    %886 = sbr.rel (0) target = $region29
  $region28: #{tpu_custom_call.1} parent=0 // pred_region
    _
  $region29: #{tpu_custom_call.1} parent=0 // pred_fallthru
    _
  // Predicated region
  $region30: #{tpu_custom_call.1} parent=0 // pred_check
    _
  $region31: #{tpu_custom_call.1} parent=0 // pred_check_branch
    %888 = sbr.rel (0) target = $region33
  $region32: #{tpu_custom_call.1} parent=0 // pred_region
    _
  $region33: #{tpu_custom_call.1} parent=0 // pred_fallthru
    _

</llo_original>
